<compile_context>
chip_gen: v7x
topology: tpu7x:2x2x1
jax: 0.10.0
libtpu: 0.0.40
codegen_flags: <defaults>
</compile_context>

<pallas_src>
import functools

import jax
import jax.numpy as jnp
from jax.experimental import pallas as pl
from jax.experimental.pallas import tpu as pltpu

NEG_INF = jnp.float32(-1e30)  # pad bias for the final layer (softmax mass ~ 0); keep f32


def _round_up(n, m):
    return ((n + m - 1) // m) * m


def _elu(x):
    # ELU with alpha=1.0 (PyTorch default): x if x > 0 else exp(x) - 1.
    # Dtype-preserving (bf16 in the kernel's hidden layers, f32 elsewhere).
    zero = jnp.zeros((), dtype=x.dtype)
    one = jnp.ones((), dtype=x.dtype)
    return jnp.where(x > zero, x, jnp.exp(jnp.minimum(x, zero)) - one)


def nn_actor_kernel(x_ref, w_ref, b_ref, o_ref, *, num_layers, state_size):
    # x_ref : [TB, S]    f32   (unpadded states, batch-tiled)
    # w_ref : [L, P, P]  bf16  (zero-padded weight slab, VMEM-resident)
    # b_ref : [L, 1, P]  f32   (zero-padded biases; last layer pad = NEG_INF)
    # o_ref : [TB, P]    bf16  (lane-dense softmax slab)
    x = x_ref[...].astype(jnp.bfloat16)                    # [TB, S]
    w0 = w_ref[0, :state_size, :]                          # static slice, free
    z = jnp.dot(x, w0, preferred_element_type=jnp.float32) + b_ref[0]
    h = _elu(z.astype(jnp.bfloat16))                       # bf16 VPU/EUP path

    for layer in range(1, num_layers - 1):
        z = jnp.dot(h, w_ref[layer],
                    preferred_element_type=jnp.float32) + b_ref[layer]
        h = _elu(z.astype(jnp.bfloat16))

    logits = jnp.dot(h, w_ref[num_layers - 1],
                     preferred_element_type=jnp.float32) + b_ref[num_layers - 1]
    # Softmax in f32; exact divide so rows sum to 1 (within f32 rounding).
    m = jnp.max(logits, axis=-1, keepdims=True)
    e = jnp.exp(logits - m)
    denom = jnp.sum(e, axis=-1, keepdims=True)
    o_ref[...] = (e / denom).astype(o_ref.dtype)


def init_params(key, state_size, action_size, hidden_layers=(128, 64, 32)):
    """PyTorch nn.Linear-style init (U[-1/sqrt(in), 1/sqrt(in)]); W stored [in, out]."""
    sizes = [state_size] + list(hidden_layers) + [action_size]
    params = []
    for i in range(len(sizes) - 1):
        fan_in, fan_out = sizes[i], sizes[i + 1]
        key, kw, kb = jax.random.split(key, 3)
        bound = 1.0 / jnp.sqrt(jnp.float32(fan_in))
        w = jax.random.uniform(kw, (fan_in, fan_out), jnp.float32, -bound, bound)
        b = jax.random.uniform(kb, (1, fan_out), jnp.float32, -bound, bound)
        params.append((w, b))
    return params


def pack_params(params):
    """Pack per-layer (W[in,out], b[1,out]) into uniform 128-padded slabs.

    Returns (w_slab bf16 [L, P, P], b_slab f32 [L, 1, P]).  Zero padding keeps
    padded hidden lanes at exactly 0 through ELU; the final layer's padded bias
    is NEG_INF (f32) so padded softmax columns get ~0 probability mass.
    """
    L = len(params)
    pad = 128
    for w, _ in params:
        pad = max(pad, _round_up(w.shape[0], 128), _round_up(w.shape[1], 128))
    w_slab = jnp.zeros((L, pad, pad), jnp.float32)
    b_slab = jnp.zeros((L, 1, pad), jnp.float32)
    for i, (w, b) in enumerate(params):
        fin, fout = w.shape
        w_slab = w_slab.at[i, :fin, :fout].set(w)
        b_slab = b_slab.at[i, 0, :fout].set(b.reshape(-1))
        if i == L - 1:
            b_slab = b_slab.at[i, 0, fout:].set(NEG_INF)
    return w_slab.astype(jnp.bfloat16), b_slab


def nn_actor_forward(x, w_slab, b_slab, action_size, *, max_block_rows=4096):
    """x: [B, state_size] float; returns softmax probs [B, action_size] f32."""
    B, state_size = x.shape
    L, pad, _ = w_slab.shape
    x = x.astype(jnp.float32)

    tb = min(max_block_rows, _round_up(max(B, 1), 8))
    if B >= 16:
        # >= 2 grid steps so dimension_semantics=("parallel",) can shard the
        # batch axis across v7x's two TensorCores (no-op on v5e/v6e).
        tb = min(tb, _round_up(-(-B // 2), 8))
    b_pad = _round_up(B, tb)
    xp = x if b_pad == B else (
        jnp.zeros((b_pad, state_size), jnp.float32).at[:B].set(x))

    grid = (b_pad // tb,)
    flops = int(2 * b_pad * (state_size * pad + (L - 1) * pad * pad))
    transcendentals = int(b_pad * pad * L)  # ELU exps + softmax exps
    bytes_accessed = int(b_pad * state_size * 4       # x (f32 in)
                         + L * pad * pad * 2          # weight slab (bf16)
                         + L * pad * 4                # bias slab (f32)
                         + b_pad * pad * 2)           # output slab (bf16)

    out = pl.pallas_call(
        functools.partial(nn_actor_kernel, num_layers=L, state_size=state_size),
        out_shape=jax.ShapeDtypeStruct((b_pad, pad), jnp.bfloat16),
        grid=grid,
        in_specs=[
            # Unpadded states, batch-tiled (last dim == full array dim: legal).
            pl.BlockSpec((tb, state_size), lambda i: (i, 0)),
            # Weights/biases: constant index_map -> DMA'd once, VMEM-resident.
            pl.BlockSpec((L, pad, pad), lambda i: (0, 0, 0)),
            pl.BlockSpec((L, 1, pad), lambda i: (0, 0, 0)),
        ],
        out_specs=pl.BlockSpec((tb, pad), lambda i: (i, 0)),   # lane-dense bf16
        compiler_params=pltpu.CompilerParams(
            dimension_semantics=("parallel",)),
        cost_estimate=pl.CostEstimate(flops=flops,
                                      transcendentals=transcendentals,
                                      bytes_accessed=bytes_accessed),
    )(xp, w_slab, b_slab)
    return out[:B, :action_size].astype(jnp.float32)


def nn_actor_reference(x, params):
    """Pure-JAX reference mirroring the kernel's numerics (bf16 matmul inputs
    and bf16 ELU, f32 accumulate, f32 softmax)."""
    h = x.astype(jnp.bfloat16)
    logits = None
    for i, (w, b) in enumerate(params):
        z = jnp.dot(h, w.astype(jnp.bfloat16),
                    preferred_element_type=jnp.float32) + b
        if i < len(params) - 1:
            h = _elu(z.astype(jnp.bfloat16))
        else:
            logits = z
    return jax.nn.softmax(logits, axis=-1)


if __name__ == "__main__":
    key = jax.random.PRNGKey(0)
    B, state_size, action_size = 8, 32, 8
    hidden_layers = (128, 64, 32)

    key, kx = jax.random.split(key)
    x = jax.random.normal(kx, (B, state_size), jnp.float32)
    params = init_params(key, state_size, action_size, hidden_layers)
    w_slab, b_slab = pack_params(params)

    out = nn_actor_forward(x, w_slab, b_slab, action_size)
    out = jax.block_until_ready(out)

    ref = nn_actor_reference(x, params)
    assert out.shape == (B, action_size)
    assert jnp.allclose(out, ref, atol=5e-3, rtol=5e-3), "mismatch vs reference"
    # bf16 output rounding bounds the row-sum error at ~2e-3.
    assert jnp.allclose(jnp.sum(out, axis=-1), 1.0, atol=5e-3), \
        "softmax rows must sum to 1"

    # TODO(synk): NNActor.update() (backward pass + optimizer step) is training
    # logic, not a forward-pass op, and is not implemented here.
    print("KERNEL_OK")
</pallas_src>

<mosaic_0001>
module attributes {stable_mosaic.version = 11 : i64} {
  func.func @nn_actor_kernel(%arg0: i32, %arg1: memref<8x32xf32, #tpu.memory_space<vmem>>, %arg2: memref<4x128x128xbf16, #tpu.memory_space<vmem>>, %arg3: memref<4x1x128xf32, #tpu.memory_space<vmem>>, %arg4: memref<8x128xbf16, #tpu.memory_space<vmem>>) attributes {dimension_semantics = [#tpu.dimension_semantics<parallel>], iteration_bounds = array<i64: 1>, scalar_prefetch = 0 : i64, scratch_operands = 0 : i64, tpu.core_type = #tpu.core_type<tc>, window_params = [{transform_indices = @transform_0, window_bounds = array<i64: 8, 32>}, {pipeline_mode = #tpu.pipeline_mode<synchronous>, transform_indices = @transform_1, window_bounds = array<i64: 4, 128, 128>}, {pipeline_mode = #tpu.pipeline_mode<synchronous>, transform_indices = @transform_2, window_bounds = array<i64: 4, 1, 128>}, {transform_indices = @transform_3, window_bounds = array<i64: 8, 128>}]} {
    %c0 = arith.constant 0 : index
    %c0_0 = arith.constant 0 : index
    %0 = vector.load %arg1[%c0, %c0_0] : memref<8x32xf32, #tpu.memory_space<vmem>>, vector<8x32xf32>
    %1 = arith.truncf %0 : vector<8x32xf32> to vector<8x32xbf16>
    %c0_1 = arith.constant 0 : index
    %c0_2 = arith.constant 0 : index
    %c0_3 = arith.constant 0 : index
    %2 = vector.load %arg2[%c0_1, %c0_2, %c0_3] : memref<4x128x128xbf16, #tpu.memory_space<vmem>>, vector<1x32x128xbf16>
    %3 = vector.shape_cast %2 : vector<1x32x128xbf16> to vector<32x128xbf16>
    %cst = arith.constant dense<0.000000e+00> : vector<8x128xf32>
    %4 = tpu.matmul %1, %3, %cst {dimension_numbers = #tpu.dot_dimension_numbers<[1], [0], [0], [1], [0, 0, 1, 1], [], []>} : vector<8x32xbf16>, vector<32x128xbf16>, vector<8x128xf32> -> vector<8x128xf32>
    %c0_4 = arith.constant 0 : index
    %c0_5 = arith.constant 0 : index
    %c0_6 = arith.constant 0 : index
    %5 = vector.load %arg3[%c0_4, %c0_5, %c0_6] : memref<4x1x128xf32, #tpu.memory_space<vmem>>, vector<1x1x128xf32>
    %6 = vector.shape_cast %5 : vector<1x1x128xf32> to vector<1x128xf32>
    %7 = vector.broadcast %6 : vector<1x128xf32> to vector<8x128xf32>
    %8 = arith.addf %4, %7 : vector<8x128xf32>
    %9 = arith.truncf %8 : vector<8x128xf32> to vector<8x128xbf16>
    %cst_7 = arith.constant 0.000000e+00 : bf16
    %10 = vector.broadcast %cst_7 : bf16 to vector<8x128xbf16>
    %11 = arith.cmpf ogt, %9, %10 : vector<8x128xbf16>
    %cst_8 = arith.constant 0.000000e+00 : bf16
    %12 = vector.broadcast %cst_8 : bf16 to vector<8x128xbf16>
    %13 = arith.minimumf %9, %12 : vector<8x128xbf16>
    %14 = math.exp %13 : vector<8x128xbf16>
    %cst_9 = arith.constant 1.000000e+00 : bf16
    %15 = vector.broadcast %cst_9 : bf16 to vector<8x128xbf16>
    %16 = arith.subf %14, %15 : vector<8x128xbf16>
    %17 = arith.select %11, %9, %16 : vector<8x128xi1>, vector<8x128xbf16>
    %c1 = arith.constant 1 : index
    %c0_10 = arith.constant 0 : index
    %c0_11 = arith.constant 0 : index
    %18 = vector.load %arg2[%c1, %c0_10, %c0_11] : memref<4x128x128xbf16, #tpu.memory_space<vmem>>, vector<1x128x128xbf16>
    %19 = vector.shape_cast %18 : vector<1x128x128xbf16> to vector<128x128xbf16>
    %cst_12 = arith.constant dense<0.000000e+00> : vector<8x128xf32>
    %20 = tpu.matmul %17, %19, %cst_12 {dimension_numbers = #tpu.dot_dimension_numbers<[1], [0], [0], [1], [0, 0, 1, 1], [], []>} : vector<8x128xbf16>, vector<128x128xbf16>, vector<8x128xf32> -> vector<8x128xf32>
    %c1_13 = arith.constant 1 : index
    %c0_14 = arith.constant 0 : index
    %c0_15 = arith.constant 0 : index
    %21 = vector.load %arg3[%c1_13, %c0_14, %c0_15] : memref<4x1x128xf32, #tpu.memory_space<vmem>>, vector<1x1x128xf32>
    %22 = vector.shape_cast %21 : vector<1x1x128xf32> to vector<1x128xf32>
    %23 = vector.broadcast %22 : vector<1x128xf32> to vector<8x128xf32>
    %24 = arith.addf %20, %23 : vector<8x128xf32>
    %25 = arith.truncf %24 : vector<8x128xf32> to vector<8x128xbf16>
    %cst_16 = arith.constant 0.000000e+00 : bf16
    %26 = vector.broadcast %cst_16 : bf16 to vector<8x128xbf16>
    %27 = arith.cmpf ogt, %25, %26 : vector<8x128xbf16>
    %cst_17 = arith.constant 0.000000e+00 : bf16
    %28 = vector.broadcast %cst_17 : bf16 to vector<8x128xbf16>
    %29 = arith.minimumf %25, %28 : vector<8x128xbf16>
    %30 = math.exp %29 : vector<8x128xbf16>
    %cst_18 = arith.constant 1.000000e+00 : bf16
    %31 = vector.broadcast %cst_18 : bf16 to vector<8x128xbf16>
    %32 = arith.subf %30, %31 : vector<8x128xbf16>
    %33 = arith.select %27, %25, %32 : vector<8x128xi1>, vector<8x128xbf16>
    %c2 = arith.constant 2 : index
    %c0_19 = arith.constant 0 : index
    %c0_20 = arith.constant 0 : index
    %34 = vector.load %arg2[%c2, %c0_19, %c0_20] : memref<4x128x128xbf16, #tpu.memory_space<vmem>>, vector<1x128x128xbf16>
    %35 = vector.shape_cast %34 : vector<1x128x128xbf16> to vector<128x128xbf16>
    %cst_21 = arith.constant dense<0.000000e+00> : vector<8x128xf32>
    %36 = tpu.matmul %33, %35, %cst_21 {dimension_numbers = #tpu.dot_dimension_numbers<[1], [0], [0], [1], [0, 0, 1, 1], [], []>} : vector<8x128xbf16>, vector<128x128xbf16>, vector<8x128xf32> -> vector<8x128xf32>
    %c2_22 = arith.constant 2 : index
    %c0_23 = arith.constant 0 : index
    %c0_24 = arith.constant 0 : index
    %37 = vector.load %arg3[%c2_22, %c0_23, %c0_24] : memref<4x1x128xf32, #tpu.memory_space<vmem>>, vector<1x1x128xf32>
    %38 = vector.shape_cast %37 : vector<1x1x128xf32> to vector<1x128xf32>
    %39 = vector.broadcast %38 : vector<1x128xf32> to vector<8x128xf32>
    %40 = arith.addf %36, %39 : vector<8x128xf32>
    %41 = arith.truncf %40 : vector<8x128xf32> to vector<8x128xbf16>
    %cst_25 = arith.constant 0.000000e+00 : bf16
    %42 = vector.broadcast %cst_25 : bf16 to vector<8x128xbf16>
    %43 = arith.cmpf ogt, %41, %42 : vector<8x128xbf16>
    %cst_26 = arith.constant 0.000000e+00 : bf16
    %44 = vector.broadcast %cst_26 : bf16 to vector<8x128xbf16>
    %45 = arith.minimumf %41, %44 : vector<8x128xbf16>
    %46 = math.exp %45 : vector<8x128xbf16>
    %cst_27 = arith.constant 1.000000e+00 : bf16
    %47 = vector.broadcast %cst_27 : bf16 to vector<8x128xbf16>
    %48 = arith.subf %46, %47 : vector<8x128xbf16>
    %49 = arith.select %43, %41, %48 : vector<8x128xi1>, vector<8x128xbf16>
    %c3 = arith.constant 3 : index
    %c0_28 = arith.constant 0 : index
    %c0_29 = arith.constant 0 : index
    %50 = vector.load %arg2[%c3, %c0_28, %c0_29] : memref<4x128x128xbf16, #tpu.memory_space<vmem>>, vector<1x128x128xbf16>
    %51 = vector.shape_cast %50 : vector<1x128x128xbf16> to vector<128x128xbf16>
    %cst_30 = arith.constant dense<0.000000e+00> : vector<8x128xf32>
    %52 = tpu.matmul %49, %51, %cst_30 {dimension_numbers = #tpu.dot_dimension_numbers<[1], [0], [0], [1], [0, 0, 1, 1], [], []>} : vector<8x128xbf16>, vector<128x128xbf16>, vector<8x128xf32> -> vector<8x128xf32>
    %c3_31 = arith.constant 3 : index
    %c0_32 = arith.constant 0 : index
    %c0_33 = arith.constant 0 : index
    %53 = vector.load %arg3[%c3_31, %c0_32, %c0_33] : memref<4x1x128xf32, #tpu.memory_space<vmem>>, vector<1x1x128xf32>
    %54 = vector.shape_cast %53 : vector<1x1x128xf32> to vector<1x128xf32>
    %55 = vector.broadcast %54 : vector<1x128xf32> to vector<8x128xf32>
    %56 = arith.addf %52, %55 : vector<8x128xf32>
    %cst_34 = arith.constant dense<0xFF800000> : vector<8xf32>
    %57 = vector.multi_reduction <maximumf>, %56, %cst_34 [1] : vector<8x128xf32> to vector<8xf32>
    %58 = vector.shape_cast %57 : vector<8xf32> to vector<8x1xf32>
    %59 = vector.broadcast %58 : vector<8x1xf32> to vector<8x128xf32>
    %60 = arith.subf %56, %59 : vector<8x128xf32>
    %61 = math.exp %60 : vector<8x128xf32>
    %cst_35 = arith.constant dense<0.000000e+00> : vector<8xf32>
    %62 = vector.multi_reduction <add>, %61, %cst_35 [1] : vector<8x128xf32> to vector<8xf32>
    %63 = vector.shape_cast %62 : vector<8xf32> to vector<8x1xf32>
    %64 = vector.broadcast %63 : vector<8x1xf32> to vector<8x128xf32>
    %65 = arith.divf %61, %64 : vector<8x128xf32>
    %66 = arith.truncf %65 : vector<8x128xf32> to vector<8x128xbf16>
    %c0_36 = arith.constant 0 : index
    %c0_37 = arith.constant 0 : index
    %67 = vector.load %arg4[%c0_36, %c0_37] : memref<8x128xbf16, #tpu.memory_space<vmem>>, vector<8x128xbf16>
    tpu.vector_store %arg4[%c0_36, %c0_37], %66 {strides = array<i32>} : memref<8x128xbf16, #tpu.memory_space<vmem>>, vector<8x128xbf16>,
    return
  }
  func.func @transform_0(%arg0: i32) -> (i32, i32) {
    %c0_i32 = arith.constant 0 : i32
    %c0_i32_0 = arith.constant 0 : i32
    return %arg0, %c0_i32 : i32, i32
  }
  func.func @transform_1(%arg0: i32) -> (i32, i32, i32) {
    %c0_i32 = arith.constant 0 : i32
    %c0_i32_0 = arith.constant 0 : i32
    %c0_i32_1 = arith.constant 0 : i32
    %c0_i32_2 = arith.constant 0 : i32
    return %c0_i32, %c0_i32_0, %c0_i32_1 : i32, i32, i32
  }
  func.func @transform_2(%arg0: i32) -> (i32, i32, i32) {
    %c0_i32 = arith.constant 0 : i32
    %c0_i32_0 = arith.constant 0 : i32
    %c0_i32_1 = arith.constant 0 : i32
    %c0_i32_2 = arith.constant 0 : i32
    return %c0_i32, %c0_i32_0, %c0_i32_1 : i32, i32, i32
  }
  func.func @transform_3(%arg0: i32) -> (i32, i32) {
    %c0_i32 = arith.constant 0 : i32
    %c0_i32_0 = arith.constant 0 : i32
    return %arg0, %c0_i32 : i32, i32
  }
}

</mosaic_0001>

<llo_original>
// kernel: tpu_custom_call.1
$region0: #{tpu_custom_call.1}
  #allocation0 [shape = 'u32[]', space=smem, size = 0x4, offset = 0x4, fixed_abs, tag = 'smem constant byte address 0x4 - core index']
  #allocation1 [shape = 'u32[144,128]{1,0:T(1,128)}', space=vmem, size = 0x12000, scoped, tag = 'internal scratch']
  %s0 = inlined_call_operand.hbm [shape: f32[8,32], index: 0, kind: input, shape index: {}]
  %s1 = inlined_call_operand.hbm [shape: bf16[4,128,128], index: 1, kind: input, shape index: {}]
  %s2 = inlined_call_operand.vmem [shape: f32[4,1,128], index: 2, kind: input, shape index: {}]
  %s3 = inlined_call_operand.hbm [shape: bf16[8,128], index: 3, kind: output, shape index: {}]
  %s4 = sld [smem:[#allocation0]]
  $region30: #{tpu_custom_call.1} parent=0
    _
  %s6 = ssub.s32 1, %s4
  %s7 = scalar_select 0, %s6, %s4
  $region1: #{tpu_custom_call.1} parent=0
    #allocation2 [shape = 'u8[4096]{0}', space=vmem, size = 0x1000, scoped, tag = 'input window, operand 0, single buffered']
    #allocation3 [shape = 's32[1]{0}', space=sflag, size = 0x4, scoped, tag = 'scoped memory for tpu_custom_call.1']
    #allocation4 [shape = 's32[1]{0}', space=sflag, size = 0x4, scoped, tag = 'scoped memory for tpu_custom_call.1']
    #allocation5 [shape = 'u8[131072]{0}', space=vmem, size = 0x20000, scoped, tag = 'input window, operand 1, single buffered']
    #allocation6 [shape = 's32[1]{0}', space=sflag, size = 0x4, scoped, tag = 'scoped memory for tpu_custom_call.1']
    #allocation7 [shape = 'u8[2048]{0}', space=vmem, size = 0x800, scoped, tag = 'output window, operand 0, single buffered']
    %8 = vsyncpa [#allocation3], 0
    %9 = vsyncpa [#allocation6], 0
    %10 = vsyncpa [#allocation4], 0
    // Predicated region
    $region2: #{tpu_custom_call.1} parent=1 // pred_check
      _
    $region3: #{tpu_custom_call.1} parent=1 // pred_check_branch
      %12 = sbr.rel (0) target = $region5
    $region4: #{tpu_custom_call.1} parent=1 // pred_region
      %s14 = ssub.s32 128, 128
      %15 = vsyncadd [#allocation3], %s14
      %s17 = sshll.u32 [#allocation2], 4
      %s18 = int_to_ptr.vmem [resolvable:$true] %s17
      %20 = dma.hbm_to_vmem [thread:$0]  %s0, 128, %s18, [#allocation3]
    $region5: #{tpu_custom_call.1} parent=1 // pred_fallthru
      _
    // Predicated region
    $region6: #{tpu_custom_call.1} parent=1 // pred_check
      _
    $region7: #{tpu_custom_call.1} parent=1 // pred_check_branch
      %22 = sbr.rel (0) target = $region9
    $region8: #{tpu_custom_call.1} parent=1 // pred_region
      %s24 = ssub.s32 4096, 4096
      %25 = vsyncadd [#allocation6], %s24
      %s26 = sshll.u32 [#allocation5], 4
      %s27 = int_to_ptr.vmem [resolvable:$true] %s26
      %32 = dma.hbm_to_vmem [thread:$0]  %s1, 4096, %s27, [#allocation6], 64, 64, 4
    $region9: #{tpu_custom_call.1} parent=1 // pred_fallthru
      _
    // Predicated region
    $region10: #{tpu_custom_call.1} parent=1 // pred_check
      _
    $region11: #{tpu_custom_call.1} parent=1 // pred_check_branch
      %34 = sbr.rel (0) target = $region13
    $region12: #{tpu_custom_call.1} parent=1 // pred_region
      _
    $region13: #{tpu_custom_call.1} parent=1 // pred_fallthru
      _
    // Predicated region
    $region14: #{tpu_custom_call.1} parent=1 // pred_check
      _
    $region15: #{tpu_custom_call.1} parent=1 // pred_check_branch
      %36 = sbr.rel (0) target = $region17
    $region16: #{tpu_custom_call.1} parent=1 // pred_region
      %37 = dma.done [#allocation3], 128
    $region17: #{tpu_custom_call.1} parent=1 // pred_fallthru
      _
    // Predicated region
    $region18: #{tpu_custom_call.1} parent=1 // pred_check
      _
    $region19: #{tpu_custom_call.1} parent=1 // pred_check_branch
      %39 = sbr.rel (0) target = $region21
    $region20: #{tpu_custom_call.1} parent=1 // pred_region
      %40 = dma.done [#allocation6], 4096
    $region21: #{tpu_custom_call.1} parent=1 // pred_fallthru
      _
    %v43 = vld [vmem:[#allocation2] sm:$0xff]
    %v44 = vpack.c.bf16 %v43, %v43
    %v45 = vld [vmem:[#allocation5] sm:$0xf]
    %v46 = vld [vmem:[#allocation5 + $0x4] sm:$0xf]
    %v47 = vld [vmem:[#allocation5 + $0x8] sm:$0xf]
    %v48 = vld [vmem:[#allocation5 + $0xc] sm:$0xf]
    %v49 = vld [vmem:[%s2] sm:$0x1]
    %v51 = vlaneseq
    %v52 = vshrl.u32 %v51, 7
    %v53 = vsub.s32 0, %v52
    %v54 = vrot.slane %v49, %v53
    %v60 = vunpack.c.l.b16 %v45
    %v61 = vunpack.c.l.b16 %v46
    %v62 = vunpack.c.l.b16 %v47
    %v63 = vunpack.c.l.b16 %v48
    %v64 = vpack.c.b16 %v61, %v60
    %v65 = vpack.c.b16 %v63, %v62
    %vm68 = vcmask 261120
    %v70 = vsel %vm68, %v44, 0
    %72 = vmatprep.subr.bf16.mxu0 0
    %73 = vmatpush1.bf16.msra.mxu0 %v64
    %74 = vmatprep.subr.bf16.mxu0 0
    %75 = vmatpush1.bf16.msra.mxu0 %v65
    %76 = vmatprep.subr.bf16.mxu0 0
    %77 = vmatpush1.bf16.msra.mxu0 0
    %78 = vmatprep.subr.bf16.mxu0 0
    %79 = vmatpush1.bf16.msra.mxu0 0
    %80 = vmatprep.subr.bf16.mxu0 0
    %81 = vmatpush1.bf16.msra.mxu0 0
    %82 = vmatprep.subr.bf16.mxu0 0
    %83 = vmatpush1.bf16.msra.mxu0 0
    %84 = vmatprep.subr.bf16.mxu0 0
    %85 = vmatpush1.bf16.msra.mxu0 0
    %86 = vmatprep.subr.bf16.mxu0 0
    %87 = vmatpush1.bf16.msra.mxu0 0
    %88 = vmatprep.subr.bf16.mxu0 0
    %89 = vmatpush1.bf16.msra.mxu0 0
    %90 = vmatprep.subr.bf16.mxu0 0
    %91 = vmatpush1.bf16.msra.mxu0 0
    %92 = vmatprep.subr.bf16.mxu0 0
    %93 = vmatpush1.bf16.msra.mxu0 0
    %94 = vmatprep.subr.bf16.mxu0 0
    %95 = vmatpush1.bf16.msra.mxu0 0
    %96 = vmatprep.subr.bf16.mxu0 0
    %97 = vmatpush1.bf16.msra.mxu0 0
    %98 = vmatprep.subr.bf16.mxu0 0
    %99 = vmatpush1.bf16.msra.mxu0 0
    %100 = vmatprep.subr.bf16.mxu0 0
    %101 = vmatpush1.bf16.msra.mxu0 0
    %102 = vmatprep.subr.bf16.mxu0 0
    %103 = vmatpush1.bf16.msra.mxu0 0
    %104 = vmatprep.mubr.bf16.mxu0 0
    %105 = vmatmul.mubr.bf16.gmra.mrb[0].mxu0 %v70
    %v106 = vpop.f32.mrb[0].mxu0
    %v107 = vadd.f32 %v54, %v106
    %v108 = vpop.f32.mrb[0].mxu0
    %v109 = vpop.f32.mrb[0].mxu0
    %v110 = vpop.f32.mrb[0].mxu0
    %111 = vdwg.mxu0
    %v112 = vpack.c.bf16 %v107, %v107
    %vm113 = vcmp.gt.bf16.partialorder %v112, 0
    %v114 = vmin.bf16 %v112, 0
    %v116 = vmul.bf16 %v114, 1069105081
    %v117 = vpow.bf16.pop %v116
    %v118 = vsub.bf16 %v117, 1065369472
    %v119 = vsel %vm113, %v112, %v118
    %s120 = scalar_lea.vmem [#allocation5], 64
    %v121 = vld [vmem:[%s120] sm:$0xf]
    %v122 = vld [vmem:[%s120 + $0x4] sm:$0xf]
    %v123 = vld [vmem:[%s120 + $0x8] sm:$0xf]
    %v124 = vld [vmem:[%s120 + $0xc] sm:$0xf]
    %v125 = vld [vmem:[%s120 + $0x10] sm:$0xf]
    %v126 = vld [vmem:[%s120 + $0x14] sm:$0xf]
    %v127 = vld [vmem:[%s120 + $0x18] sm:$0xf]
    %v128 = vld [vmem:[%s120 + $0x1c] sm:$0xf]
    %v129 = vld [vmem:[%s120 + $0x20] sm:$0xf]
    %v130 = vld [vmem:[%s120 + $0x24] sm:$0xf]
    %v131 = vld [vmem:[%s120 + $0x28] sm:$0xf]
    %v132 = vld [vmem:[%s120 + $0x2c] sm:$0xf]
    %v133 = vld [vmem:[%s120 + $0x30] sm:$0xf]
    %v134 = vld [vmem:[%s120 + $0x34] sm:$0xf]
    %v135 = vld [vmem:[%s120 + $0x38] sm:$0xf]
    %v136 = vld [vmem:[%s120 + $0x3c] sm:$0xf]
    %s137 = scalar_lea.vmem %s2, 1
    %v138 = vld [vmem:[%s137] sm:$0x1]
    %v140 = vlaneseq
    %v141 = vshrl.u32 %v140, 7
    %v142 = vsub.s32 0, %v141
    %v143 = vrot.slane %v138, %v142
    %v161 = vunpack.c.l.b16 %v121
    %v162 = vunpack.c.l.b16 %v122
    %v163 = vunpack.c.l.b16 %v123
    %v164 = vunpack.c.l.b16 %v124
    %v165 = vunpack.c.l.b16 %v125
    %v166 = vunpack.c.l.b16 %v126
    %v167 = vunpack.c.l.b16 %v127
    %v168 = vunpack.c.l.b16 %v128
    %v169 = vunpack.c.l.b16 %v129
    %v170 = vunpack.c.l.b16 %v130
    %v171 = vunpack.c.l.b16 %v131
    %v172 = vunpack.c.l.b16 %v132
    %v173 = vunpack.c.l.b16 %v133
    %v174 = vunpack.c.l.b16 %v134
    %v175 = vunpack.c.l.b16 %v135
    %v176 = vunpack.c.l.b16 %v136
    %v177 = vpack.c.b16 %v162, %v161
    %v178 = vpack.c.b16 %v164, %v163
    %v179 = vpack.c.b16 %v166, %v165
    %v180 = vpack.c.b16 %v168, %v167
    %v181 = vpack.c.b16 %v170, %v169
    %v182 = vpack.c.b16 %v172, %v171
    %v183 = vpack.c.b16 %v174, %v173
    %v184 = vpack.c.b16 %v176, %v175
    %193 = vmatprep.subr.bf16.mxu0 0
    %194 = vmatpush1.bf16.msra.mxu0 %v177
    %195 = vmatprep.subr.bf16.mxu0 0
    %196 = vmatpush1.bf16.msra.mxu0 %v178
    %197 = vmatprep.subr.bf16.mxu0 0
    %198 = vmatpush1.bf16.msra.mxu0 %v179
    %199 = vmatprep.subr.bf16.mxu0 0
    %200 = vmatpush1.bf16.msra.mxu0 %v180
    %201 = vmatprep.subr.bf16.mxu0 0
    %202 = vmatpush1.bf16.msra.mxu0 %v181
    %203 = vmatprep.subr.bf16.mxu0 0
    %204 = vmatpush1.bf16.msra.mxu0 %v182
    %205 = vmatprep.subr.bf16.mxu0 0
    %206 = vmatpush1.bf16.msra.mxu0 %v183
    %207 = vmatprep.subr.bf16.mxu0 0
    %208 = vmatpush1.bf16.msra.mxu0 %v184
    %209 = vmatprep.subr.bf16.mxu0 0
    %210 = vmatpush1.bf16.msra.mxu0 0
    %211 = vmatprep.subr.bf16.mxu0 0
    %212 = vmatpush1.bf16.msra.mxu0 0
    %213 = vmatprep.subr.bf16.mxu0 0
    %214 = vmatpush1.bf16.msra.mxu0 0
    %215 = vmatprep.subr.bf16.mxu0 0
    %216 = vmatpush1.bf16.msra.mxu0 0
    %217 = vmatprep.subr.bf16.mxu0 0
    %218 = vmatpush1.bf16.msra.mxu0 0
    %219 = vmatprep.subr.bf16.mxu0 0
    %220 = vmatpush1.bf16.msra.mxu0 0
    %221 = vmatprep.subr.bf16.mxu0 0
    %222 = vmatpush1.bf16.msra.mxu0 0
    %223 = vmatprep.subr.bf16.mxu0 0
    %224 = vmatpush1.bf16.msra.mxu0 0
    %225 = vmatprep.mubr.bf16.mxu0 0
    %226 = vmatmul.mubr.bf16.gmra.mrb[0].mxu0 %v119
    %v227 = vpop.f32.mrb[0].mxu0
    %v228 = vadd.f32 %v143, %v227
    %v229 = vpop.f32.mrb[0].mxu0
    %v230 = vpop.f32.mrb[0].mxu0
    %v231 = vpop.f32.mrb[0].mxu0
    %232 = vdwg.mxu0
    %v233 = vpack.c.bf16 %v228, %v228
    %vm234 = vcmp.gt.bf16.partialorder %v233, 0
    %v235 = vmin.bf16 %v233, 0
    %v237 = vmul.bf16 %v235, 1069105081
    %v238 = vpow.bf16.pop %v237
    %v239 = vsub.bf16 %v238, 1065369472
    %v240 = vsel %vm234, %v233, %v239
    %s241 = scalar_lea.vmem [#allocation5], 128
    %v242 = vld [vmem:[%s241] sm:$0xf]
    %v243 = vld [vmem:[%s241 + $0x4] sm:$0xf]
    %v244 = vld [vmem:[%s241 + $0x8] sm:$0xf]
    %v245 = vld [vmem:[%s241 + $0xc] sm:$0xf]
    %v246 = vld [vmem:[%s241 + $0x10] sm:$0xf]
    %v247 = vld [vmem:[%s241 + $0x14] sm:$0xf]
    %v248 = vld [vmem:[%s241 + $0x18] sm:$0xf]
    %v249 = vld [vmem:[%s241 + $0x1c] sm:$0xf]
    %v250 = vld [vmem:[%s241 + $0x20] sm:$0xf]
    %v251 = vld [vmem:[%s241 + $0x24] sm:$0xf]
    %v252 = vld [vmem:[%s241 + $0x28] sm:$0xf]
    %v253 = vld [vmem:[%s241 + $0x2c] sm:$0xf]
    %v254 = vld [vmem:[%s241 + $0x30] sm:$0xf]
    %v255 = vld [vmem:[%s241 + $0x34] sm:$0xf]
    %v256 = vld [vmem:[%s241 + $0x38] sm:$0xf]
    %v257 = vld [vmem:[%s241 + $0x3c] sm:$0xf]
    %s258 = scalar_lea.vmem %s2, 2
    %v259 = vld [vmem:[%s258] sm:$0x1]
    %v261 = vlaneseq
    %v262 = vshrl.u32 %v261, 7
    %v263 = vsub.s32 0, %v262
    %v264 = vrot.slane %v259, %v263
    %v282 = vunpack.c.l.b16 %v242
    %v283 = vunpack.c.l.b16 %v243
    %v284 = vunpack.c.l.b16 %v244
    %v285 = vunpack.c.l.b16 %v245
    %v286 = vunpack.c.l.b16 %v246
    %v287 = vunpack.c.l.b16 %v247
    %v288 = vunpack.c.l.b16 %v248
    %v289 = vunpack.c.l.b16 %v249
    %v290 = vunpack.c.l.b16 %v250
    %v291 = vunpack.c.l.b16 %v251
    %v292 = vunpack.c.l.b16 %v252
    %v293 = vunpack.c.l.b16 %v253
    %v294 = vunpack.c.l.b16 %v254
    %v295 = vunpack.c.l.b16 %v255
    %v296 = vunpack.c.l.b16 %v256
    %v297 = vunpack.c.l.b16 %v257
    %v298 = vpack.c.b16 %v283, %v282
    %v299 = vpack.c.b16 %v285, %v284
    %v300 = vpack.c.b16 %v287, %v286
    %v301 = vpack.c.b16 %v289, %v288
    %v302 = vpack.c.b16 %v291, %v290
    %v303 = vpack.c.b16 %v293, %v292
    %v304 = vpack.c.b16 %v295, %v294
    %v305 = vpack.c.b16 %v297, %v296
    %314 = vmatprep.subr.bf16.mxu0 0
    %315 = vmatpush1.bf16.msra.mxu0 %v298
    %316 = vmatprep.subr.bf16.mxu0 0
    %317 = vmatpush1.bf16.msra.mxu0 %v299
    %318 = vmatprep.subr.bf16.mxu0 0
    %319 = vmatpush1.bf16.msra.mxu0 %v300
    %320 = vmatprep.subr.bf16.mxu0 0
    %321 = vmatpush1.bf16.msra.mxu0 %v301
    %322 = vmatprep.subr.bf16.mxu0 0
    %323 = vmatpush1.bf16.msra.mxu0 %v302
    %324 = vmatprep.subr.bf16.mxu0 0
    %325 = vmatpush1.bf16.msra.mxu0 %v303
    %326 = vmatprep.subr.bf16.mxu0 0
    %327 = vmatpush1.bf16.msra.mxu0 %v304
    %328 = vmatprep.subr.bf16.mxu0 0
    %329 = vmatpush1.bf16.msra.mxu0 %v305
    %330 = vmatprep.subr.bf16.mxu0 0
    %331 = vmatpush1.bf16.msra.mxu0 0
    %332 = vmatprep.subr.bf16.mxu0 0
    %333 = vmatpush1.bf16.msra.mxu0 0
    %334 = vmatprep.subr.bf16.mxu0 0
    %335 = vmatpush1.bf16.msra.mxu0 0
    %336 = vmatprep.subr.bf16.mxu0 0
    %337 = vmatpush1.bf16.msra.mxu0 0
    %338 = vmatprep.subr.bf16.mxu0 0
    %339 = vmatpush1.bf16.msra.mxu0 0
    %340 = vmatprep.subr.bf16.mxu0 0
    %341 = vmatpush1.bf16.msra.mxu0 0
    %342 = vmatprep.subr.bf16.mxu0 0
    %343 = vmatpush1.bf16.msra.mxu0 0
    %344 = vmatprep.subr.bf16.mxu0 0
    %345 = vmatpush1.bf16.msra.mxu0 0
    %346 = vmatprep.mubr.bf16.mxu0 0
    %347 = vmatmul.mubr.bf16.gmra.mrb[0].mxu0 %v240
    %v348 = vpop.f32.mrb[0].mxu0
    %v349 = vadd.f32 %v264, %v348
    %v350 = vpop.f32.mrb[0].mxu0
    %v351 = vpop.f32.mrb[0].mxu0
    %v352 = vpop.f32.mrb[0].mxu0
    %353 = vdwg.mxu0
    %v354 = vpack.c.bf16 %v349, %v349
    %vm355 = vcmp.gt.bf16.partialorder %v354, 0
    %v356 = vmin.bf16 %v354, 0
    %v358 = vmul.bf16 %v356, 1069105081
    %v359 = vpow.bf16.pop %v358
    %v360 = vsub.bf16 %v359, 1065369472
    %v361 = vsel %vm355, %v354, %v360
    %s362 = scalar_lea.vmem [#allocation5], 192
    %v363 = vld [vmem:[%s362] sm:$0xf]
    %v364 = vld [vmem:[%s362 + $0x4] sm:$0xf]
    %v365 = vld [vmem:[%s362 + $0x8] sm:$0xf]
    %v366 = vld [vmem:[%s362 + $0xc] sm:$0xf]
    %v367 = vld [vmem:[%s362 + $0x10] sm:$0xf]
    %v368 = vld [vmem:[%s362 + $0x14] sm:$0xf]
    %v369 = vld [vmem:[%s362 + $0x18] sm:$0xf]
    %v370 = vld [vmem:[%s362 + $0x1c] sm:$0xf]
    %v371 = vld [vmem:[%s362 + $0x20] sm:$0xf]
    %v372 = vld [vmem:[%s362 + $0x24] sm:$0xf]
    %v373 = vld [vmem:[%s362 + $0x28] sm:$0xf]
    %v374 = vld [vmem:[%s362 + $0x2c] sm:$0xf]
    %v375 = vld [vmem:[%s362 + $0x30] sm:$0xf]
    %v376 = vld [vmem:[%s362 + $0x34] sm:$0xf]
    %v377 = vld [vmem:[%s362 + $0x38] sm:$0xf]
    %v378 = vld [vmem:[%s362 + $0x3c] sm:$0xf]
    %s379 = scalar_lea.vmem %s2, 3
    %v380 = vld [vmem:[%s379] sm:$0x1]
    %v382 = vlaneseq
    %v383 = vshrl.u32 %v382, 7
    %v384 = vsub.s32 0, %v383
    %v385 = vrot.slane %v380, %v384
    %v403 = vunpack.c.l.b16 %v363
    %v404 = vunpack.c.l.b16 %v364
    %v405 = vunpack.c.l.b16 %v365
    %v406 = vunpack.c.l.b16 %v366
    %v407 = vunpack.c.l.b16 %v367
    %v408 = vunpack.c.l.b16 %v368
    %v409 = vunpack.c.l.b16 %v369
    %v410 = vunpack.c.l.b16 %v370
    %v411 = vunpack.c.l.b16 %v371
    %v412 = vunpack.c.l.b16 %v372
    %v413 = vunpack.c.l.b16 %v373
    %v414 = vunpack.c.l.b16 %v374
    %v415 = vunpack.c.l.b16 %v375
    %v416 = vunpack.c.l.b16 %v376
    %v417 = vunpack.c.l.b16 %v377
    %v418 = vunpack.c.l.b16 %v378
    %v419 = vpack.c.b16 %v404, %v403
    %v420 = vpack.c.b16 %v406, %v405
    %v421 = vpack.c.b16 %v408, %v407
    %v422 = vpack.c.b16 %v410, %v409
    %v423 = vpack.c.b16 %v412, %v411
    %v424 = vpack.c.b16 %v414, %v413
    %v425 = vpack.c.b16 %v416, %v415
    %v426 = vpack.c.b16 %v418, %v417
    %435 = vmatprep.subr.bf16.mxu0 0
    %436 = vmatpush1.bf16.msra.mxu0 %v419
    %437 = vmatprep.subr.bf16.mxu0 0
    %438 = vmatpush1.bf16.msra.mxu0 %v420
    %439 = vmatprep.subr.bf16.mxu0 0
    %440 = vmatpush1.bf16.msra.mxu0 %v421
    %441 = vmatprep.subr.bf16.mxu0 0
    %442 = vmatpush1.bf16.msra.mxu0 %v422
    %443 = vmatprep.subr.bf16.mxu0 0
    %444 = vmatpush1.bf16.msra.mxu0 %v423
    %445 = vmatprep.subr.bf16.mxu0 0
    %446 = vmatpush1.bf16.msra.mxu0 %v424
    %447 = vmatprep.subr.bf16.mxu0 0
    %448 = vmatpush1.bf16.msra.mxu0 %v425
    %449 = vmatprep.subr.bf16.mxu0 0
    %450 = vmatpush1.bf16.msra.mxu0 %v426
    %451 = vmatprep.subr.bf16.mxu0 0
    %452 = vmatpush1.bf16.msra.mxu0 0
    %453 = vmatprep.subr.bf16.mxu0 0
    %454 = vmatpush1.bf16.msra.mxu0 0
    %455 = vmatprep.subr.bf16.mxu0 0
    %456 = vmatpush1.bf16.msra.mxu0 0
    %457 = vmatprep.subr.bf16.mxu0 0
    %458 = vmatpush1.bf16.msra.mxu0 0
    %459 = vmatprep.subr.bf16.mxu0 0
    %460 = vmatpush1.bf16.msra.mxu0 0
    %461 = vmatprep.subr.bf16.mxu0 0
    %462 = vmatpush1.bf16.msra.mxu0 0
    %463 = vmatprep.subr.bf16.mxu0 0
    %464 = vmatpush1.bf16.msra.mxu0 0
    %465 = vmatprep.subr.bf16.mxu0 0
    %466 = vmatpush1.bf16.msra.mxu0 0
    %467 = vmatprep.mubr.bf16.mxu0 0
    %468 = vmatmul.mubr.bf16.gmra.mrb[0].mxu0 %v361
    %v469 = vpop.f32.mrb[0].mxu0
    %v470 = vadd.f32 %v385, %v469
    %v471 = vpop.f32.mrb[0].mxu0
    %v472 = vpop.f32.mrb[0].mxu0
    %v473 = vpop.f32.mrb[0].mxu0
    %474 = vdwg.mxu0
    %475 = vmax.xlane.f32.xlu0 %v470
    %v476 = vpop.xlane.xlu0 %475
    %v477 = vsub.f32 %v470, %v476
    %v478 = vmul.f32 %v477, 1.442695
    %v479 = vpow.pop %v478
    %480 = vadd.xlane.f32.xlu0 %v479
    %v481 = vpop.xlane.xlu0 %480
    %v482 = vrcp.pop %v481
    %v483 = vmul.f32 %v479, %v482
    %v484 = vpack.c.bf16 %v483, %v483
    %485 = vst [vmem:[#allocation7] sm:$0xf] %v484
    // Predicated region
    $region22: #{tpu_custom_call.1} parent=1 // pred_check
      _
    $region23: #{tpu_custom_call.1} parent=1 // pred_check_branch
      %487 = sbr.rel (0) target = $region25
    $region24: #{tpu_custom_call.1} parent=1 // pred_region
      %s489 = ssub.s32 64, 64
      %490 = vsyncadd [#allocation4], %s489
      %s492 = sshll.u32 [#allocation7], 4
      %s493 = int_to_ptr.vmem [resolvable:$true] %s492
      %495 = dma.vmem_to_hbm [thread:$0]  %s493, 64, %s3, [#allocation4]
    $region25: #{tpu_custom_call.1} parent=1 // pred_fallthru
      _
    // Predicated region
    $region26: #{tpu_custom_call.1} parent=1 // pred_check
      _
    $region27: #{tpu_custom_call.1} parent=1 // pred_check_branch
      %497 = sbr.rel (0) target = $region29
    $region28: #{tpu_custom_call.1} parent=1 // pred_region
      %498 = dma.done [#allocation4], 64
    $region29: #{tpu_custom_call.1} parent=1 // pred_fallthru
      _
    %499 = vsyncpa [#allocation3], 1
    %500 = vsyncpa [#allocation6], 1
    %501 = vsyncpa [#allocation4], 1

</llo_original>
